<compile_context>
chip_gen: v7x
topology: tpu7x:2x2x1
jax: 0.10.0
libtpu: 0.0.40
codegen_flags: <defaults>
</compile_context>

<pallas_src>
import functools

import jax
import jax.numpy as jnp
from jax.experimental import pallas as pl
from jax.experimental.pallas import tpu as pltpu


def _round_up(x, m):
    return (x + m - 1) // m * m


def mlp_kernel(x_ref, w1_ref, b1_ref, w2_ref, b2_ref, o_ref):
    # hidden = relu(x @ W1 + b1): bf16 MXU matmul, f32 accumulate.
    h = jnp.dot(x_ref[...], w1_ref[...], preferred_element_type=jnp.float32)
    h = jnp.maximum(h + b1_ref[...], 0.0)          # f32 epilogue on the VPU
    # out = hidden @ W2 + b2: cast hidden back to bf16 for the MXU.
    o = jnp.dot(h.astype(w2_ref.dtype), w2_ref[...],
                preferred_element_type=jnp.float32)
    o_ref[...] = (o + b2_ref[...]).astype(o_ref.dtype)


@functools.partial(jax.jit, static_argnames=("block_b",))
def net_forward(x, w1, b1, w2, b2, *, block_b=256):
    """Pallas equivalent of Net.forward.

    x:  [B, n_in]  float32
    w1: [n_in, n_hid]   (PyTorch Linear weight transposed)
    b1: [n_hid]
    w2: [n_hid, n_out]
    b2: [n_out]
    returns [B, n_out] float32 logits
    """
    B, n_in = x.shape
    n_hid = w1.shape[1]
    n_out = w2.shape[1]

    LANE = 128                      # lane width; full-width MXU / lane-dense stores
    n_in_p = _round_up(n_in, LANE)
    n_hid_p = _round_up(n_hid, LANE)
    n_out_p = _round_up(n_out, LANE)

    # Batch tile: multiple of the f32 sublane (8), capped to keep VMEM modest.
    tb = min(_round_up(B, 8), block_b)
    B_p = _round_up(B, tb)

    cdt = jnp.bfloat16              # MXU operand dtype (accumulation stays f32)

    xp = jnp.zeros((B_p, n_in_p), cdt).at[:B, :n_in].set(x.astype(cdt))
    w1p = jnp.zeros((n_in_p, n_hid_p), cdt).at[:n_in, :n_hid].set(w1.astype(cdt))
    w2p = jnp.zeros((n_hid_p, n_out_p), cdt).at[:n_hid, :n_out].set(w2.astype(cdt))
    b1p = jnp.zeros((1, n_hid_p), jnp.float32).at[0, :n_hid].set(
        b1.astype(jnp.float32))
    b2p = jnp.zeros((1, n_out_p), jnp.float32).at[0, :n_out].set(
        b2.astype(jnp.float32))

    grid = (B_p // tb,)

    out_p = pl.pallas_call(
        mlp_kernel,
        out_shape=jax.ShapeDtypeStruct((B_p, n_out_p), jnp.float32),
        grid=grid,
        in_specs=[
            pl.BlockSpec((tb, n_in_p), lambda i: (i, 0)),        # x: pipelined per tile
            pl.BlockSpec((n_in_p, n_hid_p), lambda i: (0, 0)),   # W1: resident
            pl.BlockSpec((1, n_hid_p), lambda i: (0, 0)),        # b1: resident
            pl.BlockSpec((n_hid_p, n_out_p), lambda i: (0, 0)),  # W2: resident
            pl.BlockSpec((1, n_out_p), lambda i: (0, 0)),        # b2: resident
        ],
        out_specs=pl.BlockSpec((tb, n_out_p), lambda i: (i, 0)),
        compiler_params=pltpu.CompilerParams(
            dimension_semantics=("parallel",),
        ),
    )(xp, w1p, b1p, w2p, b2p)

    # Slice padding off: [B, n_out] f32 logits.
    return out_p[:B, :n_out]


def init_params(key, n_in, n_hid, n_out):
    """Deterministic init mirroring nn.Linear shapes (weights stored [in, out])."""
    k1, k2, k3, k4 = jax.random.split(key, 4)
    lim1 = 1.0 / jnp.sqrt(n_in)
    lim2 = 1.0 / jnp.sqrt(n_hid)
    w1 = jax.random.uniform(k1, (n_in, n_hid), jnp.float32, -lim1, lim1)
    b1 = jax.random.uniform(k2, (n_hid,), jnp.float32, -lim1, lim1)
    w2 = jax.random.uniform(k3, (n_hid, n_out), jnp.float32, -lim2, lim2)
    b2 = jax.random.uniform(k4, (n_out,), jnp.float32, -lim2, lim2)
    return w1, b1, w2, b2


if __name__ == "__main__":
    # Iris-like problem: 4 features, 3 classes, small hidden layer.
    B, n_in, n_hid, n_out = 8, 4, 32, 3

    key = jax.random.PRNGKey(0)
    kx, kp = jax.random.split(key)
    x = jax.random.normal(kx, (B, n_in), jnp.float32)
    w1, b1, w2, b2 = init_params(kp, n_in, n_hid, n_out)

    out = net_forward(x, w1, b1, w2, b2)
    out = jax.block_until_ready(out)

    # Reference (same math as Net.forward) in f32; kernel uses bf16 MXU
    # operands with f32 accumulation, hence the relaxed tolerance.
    ref = jnp.maximum(x @ w1 + b1, 0.0) @ w2 + b2
    assert out.shape == (B, n_out)
    assert jnp.allclose(out, ref, atol=3e-2, rtol=3e-2), (
        float(jnp.max(jnp.abs(out - ref))))

    print("KERNEL_OK")
</pallas_src>

<mosaic_0001>
module attributes {stable_mosaic.version = 11 : i64} {
  func.func @mlp_kernel(%arg0: i32, %arg1: memref<8x128xbf16, #tpu.memory_space<vmem>>, %arg2: memref<128x128xbf16, #tpu.memory_space<vmem>>, %arg3: memref<1x128xf32, #tpu.memory_space<vmem>>, %arg4: memref<128x128xbf16, #tpu.memory_space<vmem>>, %arg5: memref<1x128xf32, #tpu.memory_space<vmem>>, %arg6: memref<8x128xf32, #tpu.memory_space<vmem>>) attributes {dimension_semantics = [#tpu.dimension_semantics<parallel>], iteration_bounds = array<i64: 1>, scalar_prefetch = 0 : i64, scratch_operands = 0 : i64, tpu.core_type = #tpu.core_type<tc>, window_params = [{transform_indices = @transform_0, window_bounds = array<i64: 8, 128>}, {pipeline_mode = #tpu.pipeline_mode<synchronous>, transform_indices = @transform_1, window_bounds = array<i64: 128, 128>}, {pipeline_mode = #tpu.pipeline_mode<synchronous>, transform_indices = @transform_2, window_bounds = array<i64: 1, 128>}, {pipeline_mode = #tpu.pipeline_mode<synchronous>, transform_indices = @transform_3, window_bounds = array<i64: 128, 128>}, {pipeline_mode = #tpu.pipeline_mode<synchronous>, transform_indices = @transform_4, window_bounds = array<i64: 1, 128>}, {transform_indices = @transform_5, window_bounds = array<i64: 8, 128>}]} {
    %c0 = arith.constant 0 : index
    %c0_0 = arith.constant 0 : index
    %0 = vector.load %arg1[%c0, %c0_0] : memref<8x128xbf16, #tpu.memory_space<vmem>>, vector<8x128xbf16>
    %c0_1 = arith.constant 0 : index
    %c0_2 = arith.constant 0 : index
    %1 = vector.load %arg2[%c0_1, %c0_2] : memref<128x128xbf16, #tpu.memory_space<vmem>>, vector<128x128xbf16>
    %cst = arith.constant dense<0.000000e+00> : vector<8x128xf32>
    %2 = tpu.matmul %0, %1, %cst {dimension_numbers = #tpu.dot_dimension_numbers<[1], [0], [0], [1], [0, 0, 1, 1], [], []>} : vector<8x128xbf16>, vector<128x128xbf16>, vector<8x128xf32> -> vector<8x128xf32>
    %c0_3 = arith.constant 0 : index
    %c0_4 = arith.constant 0 : index
    %3 = vector.load %arg3[%c0_3, %c0_4] : memref<1x128xf32, #tpu.memory_space<vmem>>, vector<1x128xf32>
    %4 = vector.broadcast %3 : vector<1x128xf32> to vector<8x128xf32>
    %5 = arith.addf %2, %4 : vector<8x128xf32>
    %cst_5 = arith.constant 0.000000e+00 : f32
    %6 = vector.broadcast %cst_5 : f32 to vector<8x128xf32>
    %7 = arith.maximumf %5, %6 : vector<8x128xf32>
    %8 = arith.truncf %7 : vector<8x128xf32> to vector<8x128xbf16>
    %c0_6 = arith.constant 0 : index
    %c0_7 = arith.constant 0 : index
    %9 = vector.load %arg4[%c0_6, %c0_7] : memref<128x128xbf16, #tpu.memory_space<vmem>>, vector<128x128xbf16>
    %cst_8 = arith.constant dense<0.000000e+00> : vector<8x128xf32>
    %10 = tpu.matmul %8, %9, %cst_8 {dimension_numbers = #tpu.dot_dimension_numbers<[1], [0], [0], [1], [0, 0, 1, 1], [], []>} : vector<8x128xbf16>, vector<128x128xbf16>, vector<8x128xf32> -> vector<8x128xf32>
    %c0_9 = arith.constant 0 : index
    %c0_10 = arith.constant 0 : index
    %11 = vector.load %arg5[%c0_9, %c0_10] : memref<1x128xf32, #tpu.memory_space<vmem>>, vector<1x128xf32>
    %12 = vector.broadcast %11 : vector<1x128xf32> to vector<8x128xf32>
    %13 = arith.addf %10, %12 : vector<8x128xf32>
    %c0_11 = arith.constant 0 : index
    %c0_12 = arith.constant 0 : index
    %14 = vector.load %arg6[%c0_11, %c0_12] : memref<8x128xf32, #tpu.memory_space<vmem>>, vector<8x128xf32>
    tpu.vector_store %arg6[%c0_11, %c0_12], %13 {strides = array<i32>} : memref<8x128xf32, #tpu.memory_space<vmem>>, vector<8x128xf32>,
    return
  }
  func.func @transform_0(%arg0: i32) -> (i32, i32) {
    %c0_i32 = arith.constant 0 : i32
    %c0_i32_0 = arith.constant 0 : i32
    return %arg0, %c0_i32 : i32, i32
  }
  func.func @transform_1(%arg0: i32) -> (i32, i32) {
    %c0_i32 = arith.constant 0 : i32
    %c0_i32_0 = arith.constant 0 : i32
    %c0_i32_1 = arith.constant 0 : i32
    return %c0_i32, %c0_i32_0 : i32, i32
  }
  func.func @transform_2(%arg0: i32) -> (i32, i32) {
    %c0_i32 = arith.constant 0 : i32
    %c0_i32_0 = arith.constant 0 : i32
    %c0_i32_1 = arith.constant 0 : i32
    return %c0_i32, %c0_i32_0 : i32, i32
  }
  func.func @transform_3(%arg0: i32) -> (i32, i32) {
    %c0_i32 = arith.constant 0 : i32
    %c0_i32_0 = arith.constant 0 : i32
    %c0_i32_1 = arith.constant 0 : i32
    return %c0_i32, %c0_i32_0 : i32, i32
  }
  func.func @transform_4(%arg0: i32) -> (i32, i32) {
    %c0_i32 = arith.constant 0 : i32
    %c0_i32_0 = arith.constant 0 : i32
    %c0_i32_1 = arith.constant 0 : i32
    return %c0_i32, %c0_i32_0 : i32, i32
  }
  func.func @transform_5(%arg0: i32) -> (i32, i32) {
    %c0_i32 = arith.constant 0 : i32
    %c0_i32_0 = arith.constant 0 : i32
    return %arg0, %c0_i32 : i32, i32
  }
}

</mosaic_0001>

<llo_original>
// kernel: net_forward.1
$region0: #{net_forward.1}
  #allocation0 [shape = 'u32[]', space=smem, size = 0x4, offset = 0x4, fixed_abs, tag = 'smem constant byte address 0x4 - core index']
  #allocation1 [shape = 'u32[144,128]{1,0:T(1,128)}', space=vmem, size = 0x12000, scoped, tag = 'internal scratch']
  %s0 = inlined_call_operand.vmem [shape: bf16[8,128], index: 0, kind: input, shape index: {}]
  %s1 = inlined_call_operand.vmem [shape: bf16[128,128], index: 1, kind: input, shape index: {}]
  %s2 = inlined_call_operand.vmem [shape: f32[1,128], index: 2, kind: input, shape index: {}]
  %s3 = inlined_call_operand.vmem [shape: bf16[128,128], index: 3, kind: input, shape index: {}]
  %s4 = inlined_call_operand.vmem [shape: f32[1,128], index: 4, kind: input, shape index: {}]
  %s5 = inlined_call_operand.vmem [shape: f32[8,128], index: 5, kind: output, shape index: {}]
  %s6 = sld [smem:[#allocation0]]
  $region30: #{net_forward.1} parent=0
    _
  %s8 = ssub.s32 1, %s6
  %s9 = scalar_select 0, %s8, %s6
  // Predicated region
  $region2: #{net_forward.1} parent=0 // pred_check
    _
  $region3: #{net_forward.1} parent=0 // pred_check_branch
    %11 = sbr.rel (0) target = $region5
  $region4: #{net_forward.1} parent=0 // pred_region
    _
  $region5: #{net_forward.1} parent=0 // pred_fallthru
    _
  // Predicated region
  $region6: #{net_forward.1} parent=0 // pred_check
    _
  $region7: #{net_forward.1} parent=0 // pred_check_branch
    %13 = sbr.rel (0) target = $region9
  $region8: #{net_forward.1} parent=0 // pred_region
    _
  $region9: #{net_forward.1} parent=0 // pred_fallthru
    _
  // Predicated region
  $region10: #{net_forward.1} parent=0 // pred_check
    _
  $region11: #{net_forward.1} parent=0 // pred_check_branch
    %15 = sbr.rel (0) target = $region13
  $region12: #{net_forward.1} parent=0 // pred_region
    _
  $region13: #{net_forward.1} parent=0 // pred_fallthru
    _
  // Predicated region
  $region14: #{net_forward.1} parent=0 // pred_check
    _
  $region15: #{net_forward.1} parent=0 // pred_check_branch
    %17 = sbr.rel (0) target = $region17
  $region16: #{net_forward.1} parent=0 // pred_region
    _
  $region17: #{net_forward.1} parent=0 // pred_fallthru
    _
  // Predicated region
  $region18: #{net_forward.1} parent=0 // pred_check
    _
  $region19: #{net_forward.1} parent=0 // pred_check_branch
    %19 = sbr.rel (0) target = $region21
  $region20: #{net_forward.1} parent=0 // pred_region
    _
  $region21: #{net_forward.1} parent=0 // pred_fallthru
    _
  %v21 = vld [vmem:[%s0] sm:$0xf]
  %v22 = vld [vmem:[%s1] sm:$0xf]
  %v23 = vld [vmem:[%s1 + $0x4] sm:$0xf]
  %v24 = vld [vmem:[%s1 + $0x8] sm:$0xf]
  %v25 = vld [vmem:[%s1 + $0xc] sm:$0xf]
  %v26 = vld [vmem:[%s1 + $0x10] sm:$0xf]
  %v27 = vld [vmem:[%s1 + $0x14] sm:$0xf]
  %v28 = vld [vmem:[%s1 + $0x18] sm:$0xf]
  %v29 = vld [vmem:[%s1 + $0x1c] sm:$0xf]
  %v30 = vld [vmem:[%s1 + $0x20] sm:$0xf]
  %v31 = vld [vmem:[%s1 + $0x24] sm:$0xf]
  %v32 = vld [vmem:[%s1 + $0x28] sm:$0xf]
  %v33 = vld [vmem:[%s1 + $0x2c] sm:$0xf]
  %v34 = vld [vmem:[%s1 + $0x30] sm:$0xf]
  %v35 = vld [vmem:[%s1 + $0x34] sm:$0xf]
  %v36 = vld [vmem:[%s1 + $0x38] sm:$0xf]
  %v37 = vld [vmem:[%s1 + $0x3c] sm:$0xf]
  %v38 = vld [vmem:[%s2] sm:$0x1]
  %v40 = vlaneseq
  %v41 = vshrl.u32 %v40, 7
  %v42 = vsub.s32 0, %v41
  %v43 = vrot.slane %v38, %v42
  %v61 = vunpack.c.l.b16 %v22
  %v62 = vunpack.c.l.b16 %v23
  %v63 = vunpack.c.l.b16 %v24
  %v64 = vunpack.c.l.b16 %v25
  %v65 = vunpack.c.l.b16 %v26
  %v66 = vunpack.c.l.b16 %v27
  %v67 = vunpack.c.l.b16 %v28
  %v68 = vunpack.c.l.b16 %v29
  %v69 = vunpack.c.l.b16 %v30
  %v70 = vunpack.c.l.b16 %v31
  %v71 = vunpack.c.l.b16 %v32
  %v72 = vunpack.c.l.b16 %v33
  %v73 = vunpack.c.l.b16 %v34
  %v74 = vunpack.c.l.b16 %v35
  %v75 = vunpack.c.l.b16 %v36
  %v76 = vunpack.c.l.b16 %v37
  %v77 = vpack.c.b16 %v62, %v61
  %v78 = vpack.c.b16 %v64, %v63
  %v79 = vpack.c.b16 %v66, %v65
  %v80 = vpack.c.b16 %v68, %v67
  %v81 = vpack.c.b16 %v70, %v69
  %v82 = vpack.c.b16 %v72, %v71
  %v83 = vpack.c.b16 %v74, %v73
  %v84 = vpack.c.b16 %v76, %v75
  %93 = vmatprep.subr.bf16.mxu0 0
  %94 = vmatpush1.bf16.msra.mxu0 %v77
  %95 = vmatprep.subr.bf16.mxu0 0
  %96 = vmatpush1.bf16.msra.mxu0 %v78
  %97 = vmatprep.subr.bf16.mxu0 0
  %98 = vmatpush1.bf16.msra.mxu0 %v79
  %99 = vmatprep.subr.bf16.mxu0 0
  %100 = vmatpush1.bf16.msra.mxu0 %v80
  %101 = vmatprep.subr.bf16.mxu0 0
  %102 = vmatpush1.bf16.msra.mxu0 %v81
  %103 = vmatprep.subr.bf16.mxu0 0
  %104 = vmatpush1.bf16.msra.mxu0 %v82
  %105 = vmatprep.subr.bf16.mxu0 0
  %106 = vmatpush1.bf16.msra.mxu0 %v83
  %107 = vmatprep.subr.bf16.mxu0 0
  %108 = vmatpush1.bf16.msra.mxu0 %v84
  %109 = vmatprep.subr.bf16.mxu0 0
  %110 = vmatpush1.bf16.msra.mxu0 0
  %111 = vmatprep.subr.bf16.mxu0 0
  %112 = vmatpush1.bf16.msra.mxu0 0
  %113 = vmatprep.subr.bf16.mxu0 0
  %114 = vmatpush1.bf16.msra.mxu0 0
  %115 = vmatprep.subr.bf16.mxu0 0
  %116 = vmatpush1.bf16.msra.mxu0 0
  %117 = vmatprep.subr.bf16.mxu0 0
  %118 = vmatpush1.bf16.msra.mxu0 0
  %119 = vmatprep.subr.bf16.mxu0 0
  %120 = vmatpush1.bf16.msra.mxu0 0
  %121 = vmatprep.subr.bf16.mxu0 0
  %122 = vmatpush1.bf16.msra.mxu0 0
  %123 = vmatprep.subr.bf16.mxu0 0
  %124 = vmatpush1.bf16.msra.mxu0 0
  %125 = vmatprep.mubr.bf16.mxu0 0
  %126 = vmatmul.mubr.bf16.gmra.mrb[0].mxu0 %v21
  %v127 = vpop.f32.mrb[0].mxu0
  %v128 = vadd.f32 %v43, %v127
  %v129 = vpop.f32.mrb[0].mxu0
  %v130 = vpop.f32.mrb[0].mxu0
  %v131 = vpop.f32.mrb[0].mxu0
  %132 = vdwg.mxu0
  %v133 = vmax.f32 %v128, 0.0
  %v134 = vpack.c.bf16 %v133, %v133
  %v135 = vld [vmem:[%s3] sm:$0xf]
  %v136 = vld [vmem:[%s3 + $0x4] sm:$0xf]
  %v137 = vld [vmem:[%s3 + $0x8] sm:$0xf]
  %v138 = vld [vmem:[%s3 + $0xc] sm:$0xf]
  %v139 = vld [vmem:[%s3 + $0x10] sm:$0xf]
  %v140 = vld [vmem:[%s3 + $0x14] sm:$0xf]
  %v141 = vld [vmem:[%s3 + $0x18] sm:$0xf]
  %v142 = vld [vmem:[%s3 + $0x1c] sm:$0xf]
  %v143 = vld [vmem:[%s3 + $0x20] sm:$0xf]
  %v144 = vld [vmem:[%s3 + $0x24] sm:$0xf]
  %v145 = vld [vmem:[%s3 + $0x28] sm:$0xf]
  %v146 = vld [vmem:[%s3 + $0x2c] sm:$0xf]
  %v147 = vld [vmem:[%s3 + $0x30] sm:$0xf]
  %v148 = vld [vmem:[%s3 + $0x34] sm:$0xf]
  %v149 = vld [vmem:[%s3 + $0x38] sm:$0xf]
  %v150 = vld [vmem:[%s3 + $0x3c] sm:$0xf]
  %v151 = vld [vmem:[%s4] sm:$0x1]
  %v153 = vlaneseq
  %v154 = vshrl.u32 %v153, 7
  %v155 = vsub.s32 0, %v154
  %v156 = vrot.slane %v151, %v155
  %v174 = vunpack.c.l.b16 %v135
  %v175 = vunpack.c.l.b16 %v136
  %v176 = vunpack.c.l.b16 %v137
  %v177 = vunpack.c.l.b16 %v138
  %v178 = vunpack.c.l.b16 %v139
  %v179 = vunpack.c.l.b16 %v140
  %v180 = vunpack.c.l.b16 %v141
  %v181 = vunpack.c.l.b16 %v142
  %v182 = vunpack.c.l.b16 %v143
  %v183 = vunpack.c.l.b16 %v144
  %v184 = vunpack.c.l.b16 %v145
  %v185 = vunpack.c.l.b16 %v146
  %v186 = vunpack.c.l.b16 %v147
  %v187 = vunpack.c.l.b16 %v148
  %v188 = vunpack.c.l.b16 %v149
  %v189 = vunpack.c.l.b16 %v150
  %v190 = vpack.c.b16 %v175, %v174
  %v191 = vpack.c.b16 %v177, %v176
  %v192 = vpack.c.b16 %v179, %v178
  %v193 = vpack.c.b16 %v181, %v180
  %v194 = vpack.c.b16 %v183, %v182
  %v195 = vpack.c.b16 %v185, %v184
  %v196 = vpack.c.b16 %v187, %v186
  %v197 = vpack.c.b16 %v189, %v188
  %206 = vmatprep.subr.bf16.mxu0 0
  %207 = vmatpush1.bf16.msra.mxu0 %v190
  %208 = vmatprep.subr.bf16.mxu0 0
  %209 = vmatpush1.bf16.msra.mxu0 %v191
  %210 = vmatprep.subr.bf16.mxu0 0
  %211 = vmatpush1.bf16.msra.mxu0 %v192
  %212 = vmatprep.subr.bf16.mxu0 0
  %213 = vmatpush1.bf16.msra.mxu0 %v193
  %214 = vmatprep.subr.bf16.mxu0 0
  %215 = vmatpush1.bf16.msra.mxu0 %v194
  %216 = vmatprep.subr.bf16.mxu0 0
  %217 = vmatpush1.bf16.msra.mxu0 %v195
  %218 = vmatprep.subr.bf16.mxu0 0
  %219 = vmatpush1.bf16.msra.mxu0 %v196
  %220 = vmatprep.subr.bf16.mxu0 0
  %221 = vmatpush1.bf16.msra.mxu0 %v197
  %222 = vmatprep.subr.bf16.mxu0 0
  %223 = vmatpush1.bf16.msra.mxu0 0
  %224 = vmatprep.subr.bf16.mxu0 0
  %225 = vmatpush1.bf16.msra.mxu0 0
  %226 = vmatprep.subr.bf16.mxu0 0
  %227 = vmatpush1.bf16.msra.mxu0 0
  %228 = vmatprep.subr.bf16.mxu0 0
  %229 = vmatpush1.bf16.msra.mxu0 0
  %230 = vmatprep.subr.bf16.mxu0 0
  %231 = vmatpush1.bf16.msra.mxu0 0
  %232 = vmatprep.subr.bf16.mxu0 0
  %233 = vmatpush1.bf16.msra.mxu0 0
  %234 = vmatprep.subr.bf16.mxu0 0
  %235 = vmatpush1.bf16.msra.mxu0 0
  %236 = vmatprep.subr.bf16.mxu0 0
  %237 = vmatpush1.bf16.msra.mxu0 0
  %238 = vmatprep.mubr.bf16.mxu0 0
  %239 = vmatmul.mubr.bf16.gmra.mrb[0].mxu0 %v134
  %v240 = vpop.f32.mrb[0].mxu0
  %v241 = vadd.f32 %v156, %v240
  %v242 = vpop.f32.mrb[0].mxu0
  %v243 = vpop.f32.mrb[0].mxu0
  %v244 = vpop.f32.mrb[0].mxu0
  %245 = vdwg.mxu0
  %246 = vst [vmem:[%s5] sm:$0xff] %v241
  // Predicated region
  $region22: #{net_forward.1} parent=0 // pred_check
    _
  $region23: #{net_forward.1} parent=0 // pred_check_branch
    %248 = sbr.rel (0) target = $region25
  $region24: #{net_forward.1} parent=0 // pred_region
    _
  $region25: #{net_forward.1} parent=0 // pred_fallthru
    _
  // Predicated region
  $region26: #{net_forward.1} parent=0 // pred_check
    _
  $region27: #{net_forward.1} parent=0 // pred_check_branch
    %250 = sbr.rel (0) target = $region29
  $region28: #{net_forward.1} parent=0 // pred_region
    _
  $region29: #{net_forward.1} parent=0 // pred_fallthru
    _

</llo_original>
